<compile_context>
chip_gen: v7x
topology: tpu7x:2x2x1
jax: 0.10.0
libtpu: 0.0.40
codegen_flags: <defaults>
</compile_context>

<pallas_src>
import functools

import jax
import jax.numpy as jnp
from jax.experimental import pallas as pl
from jax.experimental.pallas import tpu as pltpu


def skipgram_kernel(x_ref, w1t_ref, w2t_ref, out_ref, h_ref):
    # x_ref:   (tb, V)   batch tile (input dtype)
    # w1t_ref: (V, H)    full W1^T (compute dtype, e.g. bf16)
    # w2t_ref: (H, tn)   streamed slab of W2^T
    # out_ref: (tb, tn)  output tile
    # h_ref:   (tb, H)   f32 VMEM scratch holding the hidden activations
    j = pl.program_id(1)

    @pl.when(j == 0)
    def _compute_hidden():
        h_ref[...] = jnp.dot(
            x_ref[...].astype(w1t_ref.dtype), w1t_ref[...],
            preferred_element_type=jnp.float32)

    out = jnp.dot(
        h_ref[...].astype(w2t_ref.dtype), w2t_ref[...],
        preferred_element_type=jnp.float32)
    out_ref[...] = out.astype(out_ref.dtype)


def prepare_weights(w1, w2, compute_dtype=jnp.bfloat16):
    """w1: (H, V), w2: (V, H) in nn.Linear layout -> (V, H), (H, V), cast once."""
    return w1.T.astype(compute_dtype), w2.T.astype(compute_dtype)


@functools.partial(jax.jit, static_argnames=("tb", "tn"))
def skipgram_forward(x, w1_t, w2_t, *, tb=128, tn=256):
    """x: [B, V]; w1_t: [V, H] = W1^T; w2_t: [H, V] = W2^T. Returns [B, V]."""
    B, V = x.shape
    Vw, H = w1_t.shape
    assert Vw == V and w2_t.shape == (H, V)
    assert V % 128 == 0 and H % 128 == 0, "vocab/hidden must be 128-aligned"
    assert tb % 8 == 0, "batch tile must be a multiple of 8"
    tn = min(tn, V)
    assert V % tn == 0, "tn must divide the vocab size"

    nb = pl.cdiv(B, tb)
    Bp = nb * tb
    if Bp != B:
        x = jnp.pad(x, ((0, Bp - B), (0, 0)))

    # Generation-aware VMEM budget: double-buffered inputs/output + h scratch.
    wbytes = jnp.dtype(w1_t.dtype).itemsize
    xbytes = jnp.dtype(x.dtype).itemsize
    obytes = jnp.dtype(x.dtype).itemsize
    est = (2 * (tb * V * xbytes + V * H * wbytes + H * tn * wbytes
                + tb * tn * obytes) + tb * H * 4)
    vmem_limit = int(max(16 << 20, min(2 * est, 48 << 20)))

    out = pl.pallas_call(
        skipgram_kernel,
        out_shape=jax.ShapeDtypeStruct((Bp, V), x.dtype),
        grid_spec=pltpu.PrefetchScalarGridSpec(
            num_scalar_prefetch=0,
            grid=(nb, V // tn),
            in_specs=[
                pl.BlockSpec((tb, V), lambda i, j: (i, 0)),   # x batch tile
                pl.BlockSpec((V, H), lambda i, j: (0, 0)),    # full W1^T
                pl.BlockSpec((H, tn), lambda i, j: (0, j)),   # W2^T slab
            ],
            out_specs=pl.BlockSpec((tb, tn), lambda i, j: (i, j)),
            scratch_shapes=[pltpu.VMEM((tb, H), jnp.float32)],
        ),
        compiler_params=pltpu.CompilerParams(
            dimension_semantics=("parallel", "arbitrary"),
            vmem_limit_bytes=vmem_limit,
        ),
    )(x, w1_t, w2_t)

    return out[:B] if Bp != B else out


if __name__ == "__main__":
    key = jax.random.PRNGKey(0)
    k_x, k_w1, k_w2 = jax.random.split(key, 3)

    batch = 250          # deliberately NOT a multiple of the batch tile
    vocab_size = 512
    hidden = 128

    # One-hot-ish skipgram inputs (the math is a plain dense matmul anyway).
    idx = jax.random.randint(k_x, (batch,), 0, vocab_size)
    x = jax.nn.one_hot(idx, vocab_size, dtype=jnp.float32)

    # nn.Linear weight layouts + uniform init.
    bound1 = 1.0 / jnp.sqrt(vocab_size)
    bound2 = 1.0 / jnp.sqrt(hidden)
    w1 = jax.random.uniform(k_w1, (hidden, vocab_size), jnp.float32,
                            -bound1, bound1)
    w2 = jax.random.uniform(k_w2, (vocab_size, hidden), jnp.float32,
                            -bound2, bound2)

    # One-time weight prep (transpose + bf16 cast) -- off the per-call path.
    w1_t, w2_t = prepare_weights(w1, w2, compute_dtype=jnp.bfloat16)

    out = skipgram_forward(x, w1_t, w2_t, tb=128, tn=256)
    out = jax.block_until_ready(out)

    # Reference: same bf16-quantized weights, exact f32 math (mirrors the
    # PyTorch forward; bf16 quantization of weights is the only difference
    # from the pure-f32 module, so the comparison stays tight).
    w1q = w1_t.astype(jnp.float32)   # (V, H) = W1^T
    w2q = w2_t.astype(jnp.float32)   # (H, V) = W2^T
    h_ref = jnp.dot(x, w1q, precision=jax.lax.Precision.HIGHEST)
    ref = jnp.dot(h_ref, w2q, precision=jax.lax.Precision.HIGHEST)

    assert out.shape == (batch, vocab_size)
    assert jnp.allclose(out.astype(jnp.float32), ref, atol=2e-3, rtol=2e-3), \
        float(jnp.max(jnp.abs(out.astype(jnp.float32) - ref)))

    print("KERNEL_OK")
</pallas_src>

<mosaic_0001>
module attributes {stable_mosaic.version = 11 : i64} {
  func.func @skipgram_kernel(%arg0: i32, %arg1: i32, %arg2: memref<128x512xf32, #tpu.memory_space<vmem>>, %arg3: memref<512x128xbf16, #tpu.memory_space<vmem>>, %arg4: memref<128x256xbf16, #tpu.memory_space<vmem>>, %arg5: memref<128x256xf32, #tpu.memory_space<vmem>>, %arg6: memref<128x128xf32, #tpu.memory_space<vmem>>) attributes {dimension_semantics = [#tpu.dimension_semantics<parallel>, #tpu.dimension_semantics<arbitrary>], iteration_bounds = array<i64: 2, 2>, scalar_prefetch = 0 : i64, scratch_operands = 1 : i64, tpu.core_type = #tpu.core_type<tc>, window_params = [{transform_indices = @transform_0, window_bounds = array<i64: 128, 512>}, {pipeline_mode = #tpu.pipeline_mode<synchronous>, transform_indices = @transform_1, window_bounds = array<i64: 512, 128>}, {transform_indices = @transform_2, window_bounds = array<i64: 128, 256>}, {transform_indices = @transform_3, window_bounds = array<i64: 128, 256>}]} {
    %c0_i32 = arith.constant 0 : i32
    %0 = arith.cmpi eq, %arg1, %c0_i32 : i32
    %1 = arith.extui %0 : i1 to i32
    %c0_i32_0 = arith.constant 0 : i32
    %2 = arith.cmpi ne, %1, %c0_i32_0 : i32
    scf.if %2 {
      %c0_6 = arith.constant 0 : index
      %c0_7 = arith.constant 0 : index
      %8 = vector.load %arg2[%c0_6, %c0_7] : memref<128x512xf32, #tpu.memory_space<vmem>>, vector<128x512xf32>
      %9 = arith.truncf %8 : vector<128x512xf32> to vector<128x512xbf16>
      %c0_8 = arith.constant 0 : index
      %c0_9 = arith.constant 0 : index
      %10 = vector.load %arg3[%c0_8, %c0_9] : memref<512x128xbf16, #tpu.memory_space<vmem>>, vector<512x128xbf16>
      %cst_10 = arith.constant dense<0.000000e+00> : vector<128x128xf32>
      %11 = tpu.matmul %9, %10, %cst_10 {dimension_numbers = #tpu.dot_dimension_numbers<[1], [0], [0], [1], [0, 0, 1, 1], [], []>} : vector<128x512xbf16>, vector<512x128xbf16>, vector<128x128xf32> -> vector<128x128xf32>
      %c0_11 = arith.constant 0 : index
      %c0_12 = arith.constant 0 : index
      %12 = vector.load %arg6[%c0_11, %c0_12] : memref<128x128xf32, #tpu.memory_space<vmem>>, vector<128x128xf32>
      tpu.vector_store %arg6[%c0_11, %c0_12], %11 {strides = array<i32>} : memref<128x128xf32, #tpu.memory_space<vmem>>, vector<128x128xf32>,
    } else {
    }
    %c0 = arith.constant 0 : index
    %c0_1 = arith.constant 0 : index
    %3 = vector.load %arg6[%c0, %c0_1] : memref<128x128xf32, #tpu.memory_space<vmem>>, vector<128x128xf32>
    %4 = arith.truncf %3 : vector<128x128xf32> to vector<128x128xbf16>
    %c0_2 = arith.constant 0 : index
    %c0_3 = arith.constant 0 : index
    %5 = vector.load %arg4[%c0_2, %c0_3] : memref<128x256xbf16, #tpu.memory_space<vmem>>, vector<128x256xbf16>
    %cst = arith.constant dense<0.000000e+00> : vector<128x256xf32>
    %6 = tpu.matmul %4, %5, %cst {dimension_numbers = #tpu.dot_dimension_numbers<[1], [0], [0], [1], [0, 0, 1, 1], [], []>} : vector<128x128xbf16>, vector<128x256xbf16>, vector<128x256xf32> -> vector<128x256xf32>
    %c0_4 = arith.constant 0 : index
    %c0_5 = arith.constant 0 : index
    %7 = vector.load %arg5[%c0_4, %c0_5] : memref<128x256xf32, #tpu.memory_space<vmem>>, vector<128x256xf32>
    tpu.vector_store %arg5[%c0_4, %c0_5], %6 {strides = array<i32>} : memref<128x256xf32, #tpu.memory_space<vmem>>, vector<128x256xf32>,
    return
  }
  func.func @transform_0(%arg0: i32, %arg1: i32) -> (i32, i32) {
    %c0_i32 = arith.constant 0 : i32
    %c0_i32_0 = arith.constant 0 : i32
    return %arg0, %c0_i32 : i32, i32
  }
  func.func @transform_1(%arg0: i32, %arg1: i32) -> (i32, i32) {
    %c0_i32 = arith.constant 0 : i32
    %c0_i32_0 = arith.constant 0 : i32
    %c0_i32_1 = arith.constant 0 : i32
    return %c0_i32, %c0_i32_0 : i32, i32
  }
  func.func @transform_2(%arg0: i32, %arg1: i32) -> (i32, i32) {
    %c0_i32 = arith.constant 0 : i32
    %c0_i32_0 = arith.constant 0 : i32
    return %c0_i32, %arg1 : i32, i32
  }
  func.func @transform_3(%arg0: i32, %arg1: i32) -> (i32, i32) {
    %c0_i32 = arith.constant 0 : i32
    return %arg0, %arg1 : i32, i32
  }
}

</mosaic_0001>

<llo_original>
// kernel: skipgram_forward.1
$region0: #{skipgram_forward.1}
  #allocation0 [shape = 'u32[]', space=smem, size = 0x4, offset = 0x4, fixed_abs, tag = 'smem constant byte address 0x4 - core index']
  #allocation1 [shape = 'u32[144,128]{1,0:T(1,128)}', space=vmem, size = 0x12000, scoped, tag = 'internal scratch']
  #allocation2 [shape = 'f32[128,128]{1,0:T(8,128)}', space=vmem, size = 0x10000, scoped, tag = 'scratch operand']
  %s0 = inlined_call_operand.vmem [shape: f32[256,512], index: 0, kind: input, shape index: {}]
  %s1 = inlined_call_operand.vmem [shape: bf16[512,128], index: 1, kind: input, shape index: {}]
  %s2 = inlined_call_operand.vmem [shape: bf16[128,512], index: 2, kind: input, shape index: {}]
  %s3 = inlined_call_operand.hbm [shape: f32[256,512], index: 3, kind: output, shape index: {}]
  %s4 = sld [smem:[#allocation0]]
  $region87: #{skipgram_forward.1} parent=0
    _
  %s6 = ssub.s32 1, %s4
  %s7 = scalar_select 0, %s6, %s4
  $region1: #{skipgram_forward.1} parent=0
    #allocation3 [shape = 'u8[131072]{0}', space=vmem, size = 0x20000, scoped, tag = 'input window, operand 2']
    #allocation4 [shape = 'u8[262144]{0}', space=vmem, size = 0x40000, scoped, tag = 'output window, operand 0']
    #allocation5 [shape = 's32[2]{0}', space=sflag, size = 0x8, scoped, tag = 'scoped memory for skipgram_forward.1']
    %8 = vsyncpa [#allocation5], 0
    %s9 = scalar_lea.sflag [#allocation5], 1
    %10 = vsyncpa %s9, 0
    loop: start=0, step=1, limit=6
    $region2: #{skipgram_forward.1} parent=1 // loop_pre_header
      _
    $region3: #{skipgram_forward.1} parent=1 // loop_header
      %s12 = sphi 0, %s16
      %p13 = scmp.ge.s32.totalorder %s12, 6
      %s19 = sphi 0, %s31
      %s20 = sphi 0, %s27
      %s21 = sphi 0, %s19
      %s22 = sphi 0, %s20
      %s23 = sphi 0, %s21
      %s24 = sphi 0, %s22
      %s34 = sphi 0, %s36
      %s37 = sphi 0, %s34
      %s38 = sphi 0, %s37
      %s54 = sphi 0, %s38
      %s58 = sphi 0, %s58
      %s60 = sphi 0, %s58
      %s61 = sphi 0, %s60
      %s75 = sphi 0, %s61
      %s81 = sphi 0, %s83
      %s84 = sphi 0, %s81
      %s85 = sphi 0, %s84
      %s101 = sphi 0, %s85
      %s109 = sphi 0, %s111
      %s112 = sphi 0, %s109
      %s113 = sphi 0, %s112
      %s129 = sphi 0, %s113
    $region4: #{skipgram_forward.1} parent=1 // loop_header_branch
      %15 = sbr.rel (%p13) target = $region8
    $region5: #{skipgram_forward.1} parent=1 // loop_body
      %s17 = ssub.s32 %s12, 1
      %s18 = ssub.s32 %s12, 2
      %s25 = sadd.s32 1, %s20
      %p26 = scmp.ge.s32.totalorder %s25, 2
      %s27 = scalar_select %p26, 0, %s25
      %s28 = sadd.s32 1, %s19
      %s29 = scalar_select %p26, %s28, %s19
      %p30 = scmp.ge.s32.totalorder %s29, 2
      %s31 = scalar_select %p30, 0, %s29
      %s32 = ssub.s32 %s19, %s31
      %p33 = scmp.eq.s32.totalorder %s32, 0
      %s35 = sadd.s32 %s34, 1
      %s36 = scalar_select %p33, %s34, %s35
      %p39 = pneg %p33
      %p40 = scmp.eq.s32.totalorder %s12, 3
      %p41 = por %p39, %p40
      %p42 = scmp.ne.s32.totalorder %s34, %s37
      %p43 = scmp.eq.s32.totalorder %s12, 0
      %p44 = por %p42, %p43
      %p45 = scmp.ne.s32.totalorder %s34, %s37
      %p46 = scmp.eq.s32.totalorder %s17, 3
      %p47 = por %p45, %p46
      %p48 = scmp.ne.s32.totalorder %s37, %s38
      %p49 = scmp.eq.s32.totalorder %s17, 0
      %p50 = por %p48, %p49
      %p51 = scmp.ne.s32.totalorder %s37, %s38
      %p52 = scmp.eq.s32.totalorder %s18, 3
      %p53 = por %p51, %p52
      %p55 = scmp.ne.s32.totalorder %s38, %s54
      %p56 = scmp.eq.s32.totalorder %s18, 0
      %p57 = por %p55, %p56
      %s59 = sadd.s32 %s58, 1
      %p62 = scmp.eq.s32.totalorder %s12, 3
      %p63 = scmp.ne.s32.totalorder %s58, %s60
      %p64 = scmp.eq.s32.totalorder %s12, 0
      %p65 = por %p63, %p64
      %p66 = scmp.ne.s32.totalorder %s58, %s60
      %p67 = scmp.eq.s32.totalorder %s17, 3
      %p68 = por %p66, %p67
      %p69 = scmp.ne.s32.totalorder %s60, %s61
      %p70 = scmp.eq.s32.totalorder %s17, 0
      %p71 = por %p69, %p70
      %p72 = scmp.ne.s32.totalorder %s60, %s61
      %p73 = scmp.eq.s32.totalorder %s18, 3
      %p74 = por %p72, %p73
      %p76 = scmp.ne.s32.totalorder %s61, %s75
      %p77 = scmp.eq.s32.totalorder %s18, 0
      %p78 = por %p76, %p77
      %s79 = ssub.s32 %s20, %s27
      %p80 = scmp.eq.s32.totalorder %s79, 0
      %s82 = sadd.s32 %s81, 1
      %s83 = scalar_select %p80, %s81, %s82
      %p86 = pneg %p80
      %p87 = scmp.eq.s32.totalorder %s12, 3
      %p88 = por %p86, %p87
      %p89 = scmp.ne.s32.totalorder %s81, %s84
      %p90 = scmp.eq.s32.totalorder %s12, 0
      %p91 = por %p89, %p90
      %p92 = scmp.ne.s32.totalorder %s81, %s84
      %p93 = scmp.eq.s32.totalorder %s17, 3
      %p94 = por %p92, %p93
      %p95 = scmp.ne.s32.totalorder %s84, %s85
      %p96 = scmp.eq.s32.totalorder %s17, 0
      %p97 = por %p95, %p96
      %p98 = scmp.ne.s32.totalorder %s84, %s85
      %p99 = scmp.eq.s32.totalorder %s18, 3
      %p100 = por %p98, %p99
      %p102 = scmp.ne.s32.totalorder %s85, %s101
      %p103 = scmp.eq.s32.totalorder %s18, 0
      %p104 = por %p102, %p103
      %s105 = ssub.s32 %s19, %s31
      %s106 = ssub.s32 %s20, %s27
      %s107 = sor.u32 %s105, %s106
      %p108 = scmp.eq.s32.totalorder %s107, 0
      %s110 = sadd.s32 %s109, 1
      %s111 = scalar_select %p108, %s109, %s110
      %p114 = pneg %p108
      %p115 = scmp.eq.s32.totalorder %s12, 3
      %p116 = por %p114, %p115
      %p117 = scmp.ne.s32.totalorder %s109, %s112
      %p118 = scmp.eq.s32.totalorder %s12, 0
      %p119 = por %p117, %p118
      %p120 = scmp.ne.s32.totalorder %s109, %s112
      %p121 = scmp.eq.s32.totalorder %s17, 3
      %p122 = por %p120, %p121
      %p123 = scmp.ne.s32.totalorder %s112, %s113
      %p124 = scmp.eq.s32.totalorder %s17, 0
      %p125 = por %p123, %p124
      %p126 = scmp.ne.s32.totalorder %s112, %s113
      %p127 = scmp.eq.s32.totalorder %s18, 3
      %p128 = por %p126, %p127
      %p130 = scmp.ne.s32.totalorder %s113, %s129
      %p131 = scmp.eq.s32.totalorder %s18, 0
      %p132 = por %p130, %p131
      %p133 = scmp.le.s32.totalorder 1, %s12
      %p134 = scmp.lt.s32.totalorder %s12, 5
      %p135 = pnand %p133, %p134
      %p136 = pneg %p135
      // Predicated region
      $region9: #{skipgram_forward.1} parent=5 // pred_check
        _
      $region10: #{skipgram_forward.1} parent=5 // pred_check_branch
        %138 = sbr.rel (%p135) target = $region12
      $region11: #{skipgram_forward.1} parent=5 // pred_region
        %s139 = ssub.s32 %s12, 1
        // Predicated region
        $region13: #{skipgram_forward.1} parent=11 // pred_check
          %p140 = pneg %p71
        $region14: #{skipgram_forward.1} parent=11 // pred_check_branch
          %142 = sbr.rel (%p140) target = $region16
        $region15: #{skipgram_forward.1} parent=11 // pred_region
          _
        $region16: #{skipgram_forward.1} parent=11 // pred_fallthru
          _
      $region12: #{skipgram_forward.1} parent=5 // pred_fallthru
        _
      %p143 = scmp.lt.s32.totalorder %s12, 4
      // Predicated region
      $region17: #{skipgram_forward.1} parent=5 // pred_check
        %p144 = pneg %p143
      $region18: #{skipgram_forward.1} parent=5 // pred_check_branch
        %146 = sbr.rel (%p144) target = $region20
      $region19: #{skipgram_forward.1} parent=5 // pred_region
        // Predicated region
        $region21: #{skipgram_forward.1} parent=19 // pred_check
          %p147 = pneg %p44
        $region22: #{skipgram_forward.1} parent=19 // pred_check_branch
          %149 = sbr.rel (%p147) target = $region24
        $region23: #{skipgram_forward.1} parent=19 // pred_region
          %s150 = smul.u32 16, %s19
          %p151 = scmp.lt.s32.totalorder %s150, 31
          %s152 = scalar_select %p151, %s150, 31
          %s153 = smul.addr %s152, 4
          %s154 = smul.addr %s153, 8
          %s155 = scalar_lea.vmem %s0, %s154
          %s156 = smul.u32 16, %s19
        $region24: #{skipgram_forward.1} parent=19 // pred_fallthru
          _
        // Predicated region
        $region25: #{skipgram_forward.1} parent=19 // pred_check
          %p157 = pneg %p91
        $region26: #{skipgram_forward.1} parent=19 // pred_check_branch
          %159 = sbr.rel (%p157) target = $region28
        $region27: #{skipgram_forward.1} parent=19 // pred_region
          %s160 = sand.u32 %s81, 1
          %s161 = sand.u32 %s81, 1
          %s162 = smul.addr %s161, 128
          %s163 = scalar_lea.vmem [#allocation3], %s162
          %s164 = smul.u32 2, %s20
          %s165 = smul.addr %s164, 4
          %s166 = scalar_lea.vmem %s2, %s165
          // Predicated region
          $region29: #{skipgram_forward.1} parent=27 // pred_check
            _
          $region30: #{skipgram_forward.1} parent=27 // pred_check_branch
            %168 = sbr.rel (0) target = $region32
          $region31: #{skipgram_forward.1} parent=27 // pred_region
            // Predicated region
            $region33: #{skipgram_forward.1} parent=31 // pred_check
              _
            $region34: #{skipgram_forward.1} parent=31 // pred_check_branch
              %170 = sbr.rel (0) target = $region36
            $region35: #{skipgram_forward.1} parent=31 // pred_region
              // Predicated region
              $region48: #{skipgram_forward.1} parent=35 // pred_check
                _
              $region49: #{skipgram_forward.1} parent=35 // pred_check_branch
                %215 = sbr.rel (0) target = $region51
              $region50: #{skipgram_forward.1} parent=35 // pred_region
                loop: start=0, step=1, limit=1
                $region52: #{skipgram_forward.1} parent=50 // loop_pre_header
                  _
                $region53: #{skipgram_forward.1} parent=50 // loop_header
                  %s217 = sphi 0, %s221
                  %p218 = scmp.ge.s32.totalorder %s217, 1
                  %s222 = sphi %s166, %s166
                  %s223 = sphi %s163, %s163
                $region54: #{skipgram_forward.1} parent=50 // loop_header_branch
                  %220 = sbr.rel (%p218) target = $region58
                $region55: #{skipgram_forward.1} parent=50 // loop_body
                  %v224 = vld [vmem:[%s222] sm:$0xff]
                  %225 = vst [vmem:[%s223] sm:$0xff] %v224
                  %v226 = vld [vmem:[%s222 + $0x10] sm:$0xff]
                  %227 = vst [vmem:[%s223 + $0x8] sm:$0xff] %v226
                  %v228 = vld [vmem:[%s222 + $0x20] sm:$0xff]
                  %229 = vst [vmem:[%s223 + $0x10] sm:$0xff] %v228
                  %v230 = vld [vmem:[%s222 + $0x30] sm:$0xff]
                  %231 = vst [vmem:[%s223 + $0x18] sm:$0xff] %v230
                  %v232 = vld [vmem:[%s222 + $0x40] sm:$0xff]
                  %233 = vst [vmem:[%s223 + $0x20] sm:$0xff] %v232
                  %v234 = vld [vmem:[%s222 + $0x50] sm:$0xff]
                  %235 = vst [vmem:[%s223 + $0x28] sm:$0xff] %v234
                  %v236 = vld [vmem:[%s222 + $0x60] sm:$0xff]
                  %237 = vst [vmem:[%s223 + $0x30] sm:$0xff] %v236
                  %v238 = vld [vmem:[%s222 + $0x70] sm:$0xff]
                  %239 = vst [vmem:[%s223 + $0x38] sm:$0xff] %v238
                  %v240 = vld [vmem:[%s222 + $0x80] sm:$0xff]
                  %241 = vst [vmem:[%s223 + $0x40] sm:$0xff] %v240
                  %v242 = vld [vmem:[%s222 + $0x90] sm:$0xff]
                  %243 = vst [vmem:[%s223 + $0x48] sm:$0xff] %v242
                  %v244 = vld [vmem:[%s222 + $0xa0] sm:$0xff]
                  %245 = vst [vmem:[%s223 + $0x50] sm:$0xff] %v244
                  %v246 = vld [vmem:[%s222 + $0xb0] sm:$0xff]
                  %247 = vst [vmem:[%s223 + $0x58] sm:$0xff] %v246
                  %v248 = vld [vmem:[%s222 + $0xc0] sm:$0xff]
                  %249 = vst [vmem:[%s223 + $0x60] sm:$0xff] %v248
                  %v250 = vld [vmem:[%s222 + $0xd0] sm:$0xff]
                  %251 = vst [vmem:[%s223 + $0x68] sm:$0xff] %v250
                  %v252 = vld [vmem:[%s222 + $0xe0] sm:$0xff]
                  %253 = vst [vmem:[%s223 + $0x70] sm:$0xff] %v252
                  %v254 = vld [vmem:[%s222 + $0xf0] sm:$0xff]
                  %255 = vst [vmem:[%s223 + $0x78] sm:$0xff] %v254
                $region56: #{skipgram_forward.1} parent=50 // loop_footer
                  %s221 = sadd.s32 1, %s217
                $region57: #{skipgram_forward.1} parent=50 // loop_footer_branch
                  %216 = sbr.rel target = $region53
                $region58: #{skipgram_forward.1} parent=50 // loop_exit
                  _
              $region51: #{skipgram_forward.1} parent=35 // pred_fallthru
                _
              // Predicated region
              $region59: #{skipgram_forward.1} parent=35 // pred_check
                _
              $region60: #{skipgram_forward.1} parent=35 // pred_check_branch
                %257 = sbr.rel target = $region62
              $region61: #{skipgram_forward.1} parent=35 // pred_region
                _
              $region62: #{skipgram_forward.1} parent=35 // pred_fallthru
                _
            $region36: #{skipgram_forward.1} parent=31 // pred_fallthru
              _
            // Predicated region
            $region37: #{skipgram_forward.1} parent=31 // pred_check
              _
            $region38: #{skipgram_forward.1} parent=31 // pred_check_branch
              %172 = sbr.rel target = $region40
            $region39: #{skipgram_forward.1} parent=31 // pred_region
              loop: start=0, step=1, limit=1
              $region41: #{skipgram_forward.1} parent=39 // loop_pre_header
                _
              $region42: #{skipgram_forward.1} parent=39 // loop_header
                %s175 = sphi 0, %s179
                %p176 = scmp.ge.s32.totalorder %s175, 1
                %s180 = sphi %s166, %s166
                %s181 = sphi %s163, %s163
              $region43: #{skipgram_forward.1} parent=39 // loop_header_branch
                %178 = sbr.rel (%p176) target = $region47
              $region44: #{skipgram_forward.1} parent=39 // loop_body
                %v182 = vld [vmem:[%s180] sm:$0xff]
                %183 = vst [vmem:[%s181] sm:$0xff] %v182
                %v184 = vld [vmem:[%s180 + $0x10] sm:$0xff]
                %185 = vst [vmem:[%s181 + $0x8] sm:$0xff] %v184
                %v186 = vld [vmem:[%s180 + $0x20] sm:$0xff]
                %187 = vst [vmem:[%s181 + $0x10] sm:$0xff] %v186
                %v188 = vld [vmem:[%s180 + $0x30] sm:$0xff]
                %189 = vst [vmem:[%s181 + $0x18] sm:$0xff] %v188
                %v190 = vld [vmem:[%s180 + $0x40] sm:$0xff]
                %191 = vst [vmem:[%s181 + $0x20] sm:$0xff] %v190
                %v192 = vld [vmem:[%s180 + $0x50] sm:$0xff]
                %193 = vst [vmem:[%s181 + $0x28] sm:$0xff] %v192
                %v194 = vld [vmem:[%s180 + $0x60] sm:$0xff]
                %195 = vst [vmem:[%s181 + $0x30] sm:$0xff] %v194
                %v196 = vld [vmem:[%s180 + $0x70] sm:$0xff]
                %197 = vst [vmem:[%s181 + $0x38] sm:$0xff] %v196
                %v198 = vld [vmem:[%s180 + $0x80] sm:$0xff]
                %199 = vst [vmem:[%s181 + $0x40] sm:$0xff] %v198
                %v200 = vld [vmem:[%s180 + $0x90] sm:$0xff]
                %201 = vst [vmem:[%s181 + $0x48] sm:$0xff] %v200
                %v202 = vld [vmem:[%s180 + $0xa0] sm:$0xff]
                %203 = vst [vmem:[%s181 + $0x50] sm:$0xff] %v202
                %v204 = vld [vmem:[%s180 + $0xb0] sm:$0xff]
                %205 = vst [vmem:[%s181 + $0x58] sm:$0xff] %v204
                %v206 = vld [vmem:[%s180 + $0xc0] sm:$0xff]
                %207 = vst [vmem:[%s181 + $0x60] sm:$0xff] %v206
                %v208 = vld [vmem:[%s180 + $0xd0] sm:$0xff]
                %209 = vst [vmem:[%s181 + $0x68] sm:$0xff] %v208
                %v210 = vld [vmem:[%s180 + $0xe0] sm:$0xff]
                %211 = vst [vmem:[%s181 + $0x70] sm:$0xff] %v210
                %v212 = vld [vmem:[%s180 + $0xf0] sm:$0xff]
                %213 = vst [vmem:[%s181 + $0x78] sm:$0xff] %v212
              $region45: #{skipgram_forward.1} parent=39 // loop_footer
                %s179 = sadd.s32 1, %s175
              $region46: #{skipgram_forward.1} parent=39 // loop_footer_branch
                %174 = sbr.rel target = $region42
              $region47: #{skipgram_forward.1} parent=39 // loop_exit
                _
            $region40: #{skipgram_forward.1} parent=31 // pred_fallthru
              _
          $region32: #{skipgram_forward.1} parent=27 // pred_fallthru
            _
          %258 = vnop
        $region28: #{skipgram_forward.1} parent=19 // pred_fallthru
          _
      $region20: #{skipgram_forward.1} parent=5 // pred_fallthru
        _
      %p259 = scmp.le.s32.totalorder 1, %s12
      %p260 = scmp.lt.s32.totalorder %s12, 5
      %p261 = pnand %p259, %p260
      %p262 = pneg %p261
      // Predicated region
      $region63: #{skipgram_forward.1} parent=5 // pred_check
        _
      $region64: #{skipgram_forward.1} parent=5 // pred_check_branch
        %264 = sbr.rel (%p261) target = $region66
      $region65: #{skipgram_forward.1} parent=5 // pred_region
        %s265 = ssub.s32 %s12, 1
        %s266 = sand.u32 %s84, 1
        %s267 = sand.u32 %s84, 1
        %s268 = smul.addr %s267, 128
        %s269 = scalar_lea.vmem [#allocation3], %s268
        // Predicated region
        $region67: #{skipgram_forward.1} parent=65 // pred_check
          %p270 = pneg %p97
        $region68: #{skipgram_forward.1} parent=65 // pred_check_branch
          %272 = sbr.rel (%p270) target = $region70
        $region69: #{skipgram_forward.1} parent=65 // pred_region
          _
        $region70: #{skipgram_forward.1} parent=65 // pred_fallthru
          _
        %s273 = smul.u32 16, %s21
        %p274 = scmp.lt.s32.totalorder %s273, 31
        %s275 = scalar_select %p274, %s273, 31
        %s276 = smul.addr %s275, 4
        %s277 = smul.addr %s276, 8
        %s278 = scalar_lea.vmem %s0, %s277
        %p279 = pneg %p50
        %p280 = pneg %p47
        %p281 = pneg %p71
        %p282 = pneg %p68
        %s283 = sand.u32 %s84, 1
        %s284 = sand.u32 %s84, 1
        %s285 = smul.addr %s284, 128
        %s286 = scalar_lea.vmem [#allocation3], %s285
        %p287 = pneg %p97
        %p288 = pneg %p94
        %p289 = pneg %p125
        %p290 = pneg %p122
        %s291 = sand.u32 %s112, 1
        %s292 = scalar_lea.sflag [#allocation5], %s291
        %s293 = sand.u32 %s112, 1
        %s294 = smul.addr %s293, 256
        %s295 = scalar_lea.vmem [#allocation4], %s294
        %s296 = smul.u32 16, %s21
        %p297 = scmp.lt.s32.totalorder %s296, 31
        %s298 = scalar_select %p297, %s296, 31
        %s299 = smul.addr %s298, 4
        %s300 = smul.addr %s299, 8
        %s301 = scalar_lea.vmem %s0, %s300
        %s302 = smul.u32 16, %s21
        %s303 = smul.u32 2, %s22
        %s304 = smul.u32 16, %s21
        %s305 = smul.u32 2, %s22
        %p307 = scmp.eq.s32.totalorder %s22, 0
        // Predicated region
        $region71: #{skipgram_forward.1} parent=65 // pred_check
          %p308 = pneg %p307
        $region72: #{skipgram_forward.1} parent=65 // pred_check_branch
          %310 = sbr.rel (%p308) target = $region74
        $region73: #{skipgram_forward.1} parent=65 // pred_region
          %v311 = vld [vmem:[%s301] sm:$0xff]
          %v312 = vld [vmem:[%s301 + $0x8] sm:$0xff]
          %v313 = vld [vmem:[%s301 + $0x10] sm:$0xff]
          %v314 = vld [vmem:[%s301 + $0x18] sm:$0xff]
          %v315 = vld [vmem:[%s301 + $0x20] sm:$0xff]
          %v316 = vld [vmem:[%s301 + $0x28] sm:$0xff]
          %v317 = vld [vmem:[%s301 + $0x30] sm:$0xff]
          %v318 = vld [vmem:[%s301 + $0x38] sm:$0xff]
          %v319 = vld [vmem:[%s301 + $0x40] sm:$0xff]
          %v320 = vld [vmem:[%s301 + $0x48] sm:$0xff]
          %v321 = vld [vmem:[%s301 + $0x50] sm:$0xff]
          %v322 = vld [vmem:[%s301 + $0x58] sm:$0xff]
          %v323 = vld [vmem:[%s301 + $0x60] sm:$0xff]
          %v324 = vld [vmem:[%s301 + $0x68] sm:$0xff]
          %v325 = vld [vmem:[%s301 + $0x70] sm:$0xff]
          %v326 = vld [vmem:[%s301 + $0x78] sm:$0xff]
          %v327 = vld [vmem:[%s301 + $0x80] sm:$0xff]
          %v328 = vld [vmem:[%s301 + $0x88] sm:$0xff]
          %v329 = vld [vmem:[%s301 + $0x90] sm:$0xff]
          %v330 = vld [vmem:[%s301 + $0x98] sm:$0xff]
          %v331 = vld [vmem:[%s301 + $0xa0] sm:$0xff]
          %v332 = vld [vmem:[%s301 + $0xa8] sm:$0xff]
          %v333 = vld [vmem:[%s301 + $0xb0] sm:$0xff]
          %v334 = vld [vmem:[%s301 + $0xb8] sm:$0xff]
          %v335 = vld [vmem:[%s301 + $0xc0] sm:$0xff]
          %v336 = vld [vmem:[%s301 + $0xc8] sm:$0xff]
          %v337 = vld [vmem:[%s301 + $0xd0] sm:$0xff]
          %v338 = vld [vmem:[%s301 + $0xd8] sm:$0xff]
          %v339 = vld [vmem:[%s301 + $0xe0] sm:$0xff]
          %v340 = vld [vmem:[%s301 + $0xe8] sm:$0xff]
          %v341 = vld [vmem:[%s301 + $0xf0] sm:$0xff]
          %v342 = vld [vmem:[%s301 + $0xf8] sm:$0xff]
          %v343 = vld [vmem:[%s301 + $0x100] sm:$0xff]
          %v344 = vld [vmem:[%s301 + $0x108] sm:$0xff]
          %v345 = vld [vmem:[%s301 + $0x110] sm:$0xff]
          %v346 = vld [vmem:[%s301 + $0x118] sm:$0xff]
          %v347 = vld [vmem:[%s301 + $0x120] sm:$0xff]
          %v348 = vld [vmem:[%s301 + $0x128] sm:$0xff]
          %v349 = vld [vmem:[%s301 + $0x130] sm:$0xff]
          %v350 = vld [vmem:[%s301 + $0x138] sm:$0xff]
          %v351 = vld [vmem:[%s301 + $0x140] sm:$0xff]
          %v352 = vld [vmem:[%s301 + $0x148] sm:$0xff]
          %v353 = vld [vmem:[%s301 + $0x150] sm:$0xff]
          %v354 = vld [vmem:[%s301 + $0x158] sm:$0xff]
          %v355 = vld [vmem:[%s301 + $0x160] sm:$0xff]
          %v356 = vld [vmem:[%s301 + $0x168] sm:$0xff]
          %v357 = vld [vmem:[%s301 + $0x170] sm:$0xff]
          %v358 = vld [vmem:[%s301 + $0x178] sm:$0xff]
          %v359 = vld [vmem:[%s301 + $0x180] sm:$0xff]
          %v360 = vld [vmem:[%s301 + $0x188] sm:$0xff]
          %v361 = vld [vmem:[%s301 + $0x190] sm:$0xff]
          %v362 = vld [vmem:[%s301 + $0x198] sm:$0xff]
          %v363 = vld [vmem:[%s301 + $0x1a0] sm:$0xff]
          %v364 = vld [vmem:[%s301 + $0x1a8] sm:$0xff]
          %v365 = vld [vmem:[%s301 + $0x1b0] sm:$0xff]
          %v366 = vld [vmem:[%s301 + $0x1b8] sm:$0xff]
          %v367 = vld [vmem:[%s301 + $0x1c0] sm:$0xff]
          %v368 = vld [vmem:[%s301 + $0x1c8] sm:$0xff]
          %v369 = vld [vmem:[%s301 + $0x1d0] sm:$0xff]
          %v370 = vld [vmem:[%s301 + $0x1d8] sm:$0xff]
          %v371 = vld [vmem:[%s301 + $0x1e0] sm:$0xff]
          %v372 = vld [vmem:[%s301 + $0x1e8] sm:$0xff]
          %v373 = vld [vmem:[%s301 + $0x1f0] sm:$0xff]
          %v374 = vld [vmem:[%s301 + $0x1f8] sm:$0xff]
          %v375 = vpack.c.bf16 %v315, %v311
          %v376 = vpack.c.bf16 %v316, %v312
          %v377 = vpack.c.bf16 %v317, %v313
          %v378 = vpack.c.bf16 %v318, %v314
          %v379 = vpack.c.bf16 %v323, %v319
          %v380 = vpack.c.bf16 %v324, %v320
          %v381 = vpack.c.bf16 %v325, %v321
          %v382 = vpack.c.bf16 %v326, %v322
          %v383 = vpack.c.bf16 %v331, %v327
          %v384 = vpack.c.bf16 %v332, %v328
          %v385 = vpack.c.bf16 %v333, %v329
          %v386 = vpack.c.bf16 %v334, %v330
          %v387 = vpack.c.bf16 %v339, %v335
          %v388 = vpack.c.bf16 %v340, %v336
          %v389 = vpack.c.bf16 %v341, %v337
          %v390 = vpack.c.bf16 %v342, %v338
          %v391 = vpack.c.bf16 %v347, %v343
          %v392 = vpack.c.bf16 %v348, %v344
          %v393 = vpack.c.bf16 %v349, %v345
          %v394 = vpack.c.bf16 %v350, %v346
          %v395 = vpack.c.bf16 %v355, %v351
          %v396 = vpack.c.bf16 %v356, %v352
          %v397 = vpack.c.bf16 %v357, %v353
          %v398 = vpack.c.bf16 %v358, %v354
          %v399 = vpack.c.bf16 %v363, %v359
          %v400 = vpack.c.bf16 %v364, %v360
          %v401 = vpack.c.bf16 %v365, %v361
          %v402 = vpack.c.bf16 %v366, %v362
          %v403 = vpack.c.bf16 %v371, %v367
          %v404 = vpack.c.bf16 %v372, %v368
          %v405 = vpack.c.bf16 %v373, %v369
          %v406 = vpack.c.bf16 %v374, %v370
          %v407 = vld [vmem:[%s1] sm:$0xf]
          %v408 = vld [vmem:[%s1 + $0x4] sm:$0xf]
          %v409 = vld [vmem:[%s1 + $0x8] sm:$0xf]
          %v410 = vld [vmem:[%s1 + $0xc] sm:$0xf]
          %v411 = vld [vmem:[%s1 + $0x10] sm:$0xf]
          %v412 = vld [vmem:[%s1 + $0x14] sm:$0xf]
          %v413 = vld [vmem:[%s1 + $0x18] sm:$0xf]
          %v414 = vld [vmem:[%s1 + $0x1c] sm:$0xf]
          %v415 = vld [vmem:[%s1 + $0x20] sm:$0xf]
          %v416 = vld [vmem:[%s1 + $0x24] sm:$0xf]
          %v417 = vld [vmem:[%s1 + $0x28] sm:$0xf]
          %v418 = vld [vmem:[%s1 + $0x2c] sm:$0xf]
          %v419 = vld [vmem:[%s1 + $0x30] sm:$0xf]
          %v420 = vld [vmem:[%s1 + $0x34] sm:$0xf]
          %v421 = vld [vmem:[%s1 + $0x38] sm:$0xf]
          %v422 = vld [vmem:[%s1 + $0x3c] sm:$0xf]
          %v423 = vld [vmem:[%s1 + $0x40] sm:$0xf]
          %v424 = vld [vmem:[%s1 + $0x44] sm:$0xf]
          %v425 = vld [vmem:[%s1 + $0x48] sm:$0xf]
          %v426 = vld [vmem:[%s1 + $0x4c] sm:$0xf]
          %v427 = vld [vmem:[%s1 + $0x50] sm:$0xf]
          %v428 = vld [vmem:[%s1 + $0x54] sm:$0xf]
          %v429 = vld [vmem:[%s1 + $0x58] sm:$0xf]
          %v430 = vld [vmem:[%s1 + $0x5c] sm:$0xf]
          %v431 = vld [vmem:[%s1 + $0x60] sm:$0xf]
          %v432 = vld [vmem:[%s1 + $0x64] sm:$0xf]
          %v433 = vld [vmem:[%s1 + $0x68] sm:$0xf]
          %v434 = vld [vmem:[%s1 + $0x6c] sm:$0xf]
          %v435 = vld [vmem:[%s1 + $0x70] sm:$0xf]
          %v436 = vld [vmem:[%s1 + $0x74] sm:$0xf]
          %v437 = vld [vmem:[%s1 + $0x78] sm:$0xf]
          %v438 = vld [vmem:[%s1 + $0x7c] sm:$0xf]
          %v439 = vld [vmem:[%s1 + $0x80] sm:$0xf]
          %v440 = vld [vmem:[%s1 + $0x84] sm:$0xf]
          %v441 = vld [vmem:[%s1 + $0x88] sm:$0xf]
          %v442 = vld [vmem:[%s1 + $0x8c] sm:$0xf]
          %v443 = vld [vmem:[%s1 + $0x90] sm:$0xf]
          %v444 = vld [vmem:[%s1 + $0x94] sm:$0xf]
          %v445 = vld [vmem:[%s1 + $0x98] sm:$0xf]
          %v446 = vld [vmem:[%s1 + $0x9c] sm:$0xf]
          %v447 = vld [vmem:[%s1 + $0xa0] sm:$0xf]
          %v448 = vld [vmem:[%s1 + $0xa4] sm:$0xf]
          %v449 = vld [vmem:[%s1 + $0xa8] sm:$0xf]
          %v450 = vld [vmem:[%s1 + $0xac] sm:$0xf]
          %v451 = vld [vmem:[%s1 + $0xb0] sm:$0xf]
          %v452 = vld [vmem:[%s1 + $0xb4] sm:$0xf]
          %v453 = vld [vmem:[%s1 + $0xb8] sm:$0xf]
          %v454 = vld [vmem:[%s1 + $0xbc] sm:$0xf]
          %v455 = vld [vmem:[%s1 + $0xc0] sm:$0xf]
          %v456 = vld [vmem:[%s1 + $0xc4] sm:$0xf]
          %v457 = vld [vmem:[%s1 + $0xc8] sm:$0xf]
          %v458 = vld [vmem:[%s1 + $0xcc] sm:$0xf]
          %v459 = vld [vmem:[%s1 + $0xd0] sm:$0xf]
          %v460 = vld [vmem:[%s1 + $0xd4] sm:$0xf]
          %v461 = vld [vmem:[%s1 + $0xd8] sm:$0xf]
          %v462 = vld [vmem:[%s1 + $0xdc] sm:$0xf]
          %v463 = vld [vmem:[%s1 + $0xe0] sm:$0xf]
          %v464 = vld [vmem:[%s1 + $0xe4] sm:$0xf]
          %v465 = vld [vmem:[%s1 + $0xe8] sm:$0xf]
          %v466 = vld [vmem:[%s1 + $0xec] sm:$0xf]
          %v467 = vld [vmem:[%s1 + $0xf0] sm:$0xf]
          %v468 = vld [vmem:[%s1 + $0xf4] sm:$0xf]
          %v469 = vld [vmem:[%s1 + $0xf8] sm:$0xf]
          %v470 = vld [vmem:[%s1 + $0xfc] sm:$0xf]
          %v535 = vunpack.c.l.b16 %v407
          %v536 = vunpack.c.l.b16 %v408
          %v537 = vunpack.c.l.b16 %v409
          %v538 = vunpack.c.l.b16 %v410
          %v539 = vunpack.c.l.b16 %v411
          %v540 = vunpack.c.l.b16 %v412
          %v541 = vunpack.c.l.b16 %v413
          %v542 = vunpack.c.l.b16 %v414
          %v543 = vunpack.c.l.b16 %v415
          %v544 = vunpack.c.l.b16 %v416
          %v545 = vunpack.c.l.b16 %v417
          %v546 = vunpack.c.l.b16 %v418
          %v547 = vunpack.c.l.b16 %v419
          %v548 = vunpack.c.l.b16 %v420
          %v549 = vunpack.c.l.b16 %v421
          %v550 = vunpack.c.l.b16 %v422
          %v551 = vunpack.c.l.b16 %v423
          %v552 = vunpack.c.l.b16 %v424
          %v553 = vunpack.c.l.b16 %v425
          %v554 = vunpack.c.l.b16 %v426
          %v555 = vunpack.c.l.b16 %v427
          %v556 = vunpack.c.l.b16 %v428
          %v557 = vunpack.c.l.b16 %v429
          %v558 = vunpack.c.l.b16 %v430
          %v559 = vunpack.c.l.b16 %v431
          %v560 = vunpack.c.l.b16 %v432
          %v561 = vunpack.c.l.b16 %v433
          %v562 = vunpack.c.l.b16 %v434
          %v563 = vunpack.c.l.b16 %v435
          %v564 = vunpack.c.l.b16 %v436
          %v565 = vunpack.c.l.b16 %v437
          %v566 = vunpack.c.l.b16 %v438
          %v567 = vunpack.c.l.b16 %v439
          %v568 = vunpack.c.l.b16 %v440
          %v569 = vunpack.c.l.b16 %v441
          %v570 = vunpack.c.l.b16 %v442
          %v571 = vunpack.c.l.b16 %v443
          %v572 = vunpack.c.l.b16 %v444
          %v573 = vunpack.c.l.b16 %v445
          %v574 = vunpack.c.l.b16 %v446
          %v575 = vunpack.c.l.b16 %v447
          %v576 = vunpack.c.l.b16 %v448
          %v577 = vunpack.c.l.b16 %v449
          %v578 = vunpack.c.l.b16 %v450
          %v579 = vunpack.c.l.b16 %v451
          %v580 = vunpack.c.l.b16 %v452
          %v581 = vunpack.c.l.b16 %v453
          %v582 = vunpack.c.l.b16 %v454
          %v583 = vunpack.c.l.b16 %v455
          %v584 = vunpack.c.l.b16 %v456
          %v585 = vunpack.c.l.b16 %v457
          %v586 = vunpack.c.l.b16 %v458
          %v587 = vunpack.c.l.b16 %v459
          %v588 = vunpack.c.l.b16 %v460
          %v589 = vunpack.c.l.b16 %v461
          %v590 = vunpack.c.l.b16 %v462
          %v591 = vunpack.c.l.b16 %v463
          %v592 = vunpack.c.l.b16 %v464
          %v593 = vunpack.c.l.b16 %v465
          %v594 = vunpack.c.l.b16 %v466
          %v595 = vunpack.c.l.b16 %v467
          %v596 = vunpack.c.l.b16 %v468
          %v597 = vunpack.c.l.b16 %v469
          %v598 = vunpack.c.l.b16 %v470
          %v599 = vpack.c.b16 %v536, %v535
          %v600 = vpack.c.b16 %v538, %v537
          %v601 = vpack.c.b16 %v540, %v539
          %v602 = vpack.c.b16 %v542, %v541
          %v603 = vpack.c.b16 %v544, %v543
          %v604 = vpack.c.b16 %v546, %v545
          %v605 = vpack.c.b16 %v548, %v547
          %v606 = vpack.c.b16 %v550, %v549
          %v607 = vpack.c.b16 %v552, %v551
          %v608 = vpack.c.b16 %v554, %v553
          %v609 = vpack.c.b16 %v556, %v555
          %v610 = vpack.c.b16 %v558, %v557
          %v611 = vpack.c.b16 %v560, %v559
          %v612 = vpack.c.b16 %v562, %v561
          %v613 = vpack.c.b16 %v564, %v563
          %v614 = vpack.c.b16 %v566, %v565
          %v615 = vpack.c.b16 %v568, %v567
          %v616 = vpack.c.b16 %v570, %v569
          %v617 = vpack.c.b16 %v572, %v571
          %v618 = vpack.c.b16 %v574, %v573
          %v619 = vpack.c.b16 %v576, %v575
          %v620 = vpack.c.b16 %v578, %v577
          %v621 = vpack.c.b16 %v580, %v579
          %v622 = vpack.c.b16 %v582, %v581
          %v623 = vpack.c.b16 %v584, %v583
          %v624 = vpack.c.b16 %v586, %v585
          %v625 = vpack.c.b16 %v588, %v587
          %v626 = vpack.c.b16 %v590, %v589
          %v627 = vpack.c.b16 %v592, %v591
          %v628 = vpack.c.b16 %v594, %v593
          %v629 = vpack.c.b16 %v596, %v595
          %v630 = vpack.c.b16 %v598, %v597
          %663 = vmatprep.subr.bf16.mxu0 0
          %664 = vmatpush1.bf16.msra.mxu0 %v599
          %665 = vmatprep.subr.bf16.mxu0 0
          %666 = vmatpush1.bf16.msra.mxu0 %v600
          %667 = vmatprep.subr.bf16.mxu0 0
          %668 = vmatpush1.bf16.msra.mxu0 %v601
          %669 = vmatprep.subr.bf16.mxu0 0
          %670 = vmatpush1.bf16.msra.mxu0 %v602
          %671 = vmatprep.subr.bf16.mxu0 0
          %672 = vmatpush1.bf16.msra.mxu0 %v603
          %673 = vmatprep.subr.bf16.mxu0 0
          %674 = vmatpush1.bf16.msra.mxu0 %v604
          %675 = vmatprep.subr.bf16.mxu0 0
          %676 = vmatpush1.bf16.msra.mxu0 %v605
          %677 = vmatprep.subr.bf16.mxu0 0
          %678 = vmatpush1.bf16.msra.mxu0 %v606
          %679 = vmatprep.subr.bf16.mxu0 0
          %680 = vmatpush1.bf16.msra.mxu0 %v607
          %681 = vmatprep.subr.bf16.mxu0 0
          %682 = vmatpush1.bf16.msra.mxu0 %v608
          %683 = vmatprep.subr.bf16.mxu0 0
          %684 = vmatpush1.bf16.msra.mxu0 %v609
          %685 = vmatprep.subr.bf16.mxu0 0
          %686 = vmatpush1.bf16.msra.mxu0 %v610
          %687 = vmatprep.subr.bf16.mxu0 0
          %688 = vmatpush1.bf16.msra.mxu0 %v611
          %689 = vmatprep.subr.bf16.mxu0 0
          %690 = vmatpush1.bf16.msra.mxu0 %v612
          %691 = vmatprep.subr.bf16.mxu0 0
          %692 = vmatpush1.bf16.msra.mxu0 %v613
          %693 = vmatprep.subr.bf16.mxu0 0
          %694 = vmatpush1.bf16.msra.mxu0 %v614
          %695 = vmatprep.mubr.bf16.mxu0 %v376
          %696 = vmatmul.mubr.bf16.gmra.mrb[0].mxu0 %v375
          %v697 = vpop.f32.mrb[0].mxu0
          %v698 = vadd.f32 0.0, %v697
          %v699 = vpop.f32.mrb[0].mxu0
          %v700 = vpop.f32.mrb[0].mxu0
          %v701 = vadd.f32 0.0, %v700
          %v702 = vpop.f32.mrb[0].mxu0
          %703 = vmatprep.mubr.bf16.mxu0 %v380
          %704 = vmatmul.mubr.bf16.gmra.mrb[0].mxu0 %v379
          %v705 = vpop.f32.mrb[0].mxu0
          %v706 = vadd.f32 0.0, %v705
          %v707 = vpop.f32.mrb[0].mxu0
          %v708 = vpop.f32.mrb[0].mxu0
          %v709 = vadd.f32 0.0, %v708
          %v710 = vpop.f32.mrb[0].mxu0
          %711 = vmatprep.mubr.bf16.mxu0 %v384
          %712 = vmatmul.mubr.bf16.gmra.mrb[0].mxu0 %v383
          %v713 = vpop.f32.mrb[0].mxu0
          %v714 = vadd.f32 0.0, %v713
          %v715 = vpop.f32.mrb[0].mxu0
          %v716 = vpop.f32.mrb[0].mxu0
          %v717 = vadd.f32 0.0, %v716
          %v718 = vpop.f32.mrb[0].mxu0
          %719 = vmatprep.mubr.bf16.mxu0 %v388
          %720 = vmatmul.mubr.bf16.gmra.mrb[0].mxu0 %v387
          %v721 = vpop.f32.mrb[0].mxu0
          %v722 = vadd.f32 0.0, %v721
          %v723 = vpop.f32.mrb[0].mxu0
          %v724 = vpop.f32.mrb[0].mxu0
          %v725 = vadd.f32 0.0, %v724
          %v726 = vpop.f32.mrb[0].mxu0
          %727 = vmatprep.mubr.bf16.mxu0 %v392
          %728 = vmatmul.mubr.bf16.gmra.mrb[0].mxu0 %v391
          %v729 = vpop.f32.mrb[0].mxu0
          %v730 = vadd.f32 0.0, %v729
          %v731 = vpop.f32.mrb[0].mxu0
          %v732 = vpop.f32.mrb[0].mxu0
          %v733 = vadd.f32 0.0, %v732
          %v734 = vpop.f32.mrb[0].mxu0
          %735 = vmatprep.mubr.bf16.mxu0 %v396
          %736 = vmatmul.mubr.bf16.gmra.mrb[0].mxu0 %v395
          %v737 = vpop.f32.mrb[0].mxu0
          %v738 = vadd.f32 0.0, %v737
          %v739 = vpop.f32.mrb[0].mxu0
          %v740 = vpop.f32.mrb[0].mxu0
          %v741 = vadd.f32 0.0, %v740
          %v742 = vpop.f32.mrb[0].mxu0
          %743 = vmatprep.mubr.bf16.mxu0 %v400
          %744 = vmatmul.mubr.bf16.gmra.mrb[0].mxu0 %v399
          %v745 = vpop.f32.mrb[0].mxu0
          %v746 = vadd.f32 0.0, %v745
          %v747 = vpop.f32.mrb[0].mxu0
          %v748 = vpop.f32.mrb[0].mxu0
          %v749 = vadd.f32 0.0, %v748
          %v750 = vpop.f32.mrb[0].mxu0
          %751 = vmatprep.mubr.bf16.mxu0 %v404
          %752 = vmatmul.mubr.bf16.gmra.mrb[0].mxu0 %v403
          %v753 = vpop.f32.mrb[0].mxu0
          %v754 = vadd.f32 0.0, %v753
          %v755 = vpop.f32.mrb[0].mxu0
          %v756 = vpop.f32.mrb[0].mxu0
          %v757 = vadd.f32 0.0, %v756
          %v758 = vpop.f32.mrb[0].mxu0
          %759 = vdwg.mxu0
          %760 = vmatprep.subr.bf16.mxu0 0
          %761 = vmatpush1.bf16.msra.mxu0 %v615
          %762 = vmatprep.subr.bf16.mxu0 0
          %763 = vmatpush1.bf16.msra.mxu0 %v616
          %764 = vmatprep.subr.bf16.mxu0 0
          %765 = vmatpush1.bf16.msra.mxu0 %v617
          %766 = vmatprep.subr.bf16.mxu0 0
          %767 = vmatpush1.bf16.msra.mxu0 %v618
          %768 = vmatprep.subr.bf16.mxu0 0
          %769 = vmatpush1.bf16.msra.mxu0 %v619
          %770 = vmatprep.subr.bf16.mxu0 0
          %771 = vmatpush1.bf16.msra.mxu0 %v620
          %772 = vmatprep.subr.bf16.mxu0 0
          %773 = vmatpush1.bf16.msra.mxu0 %v621
          %774 = vmatprep.subr.bf16.mxu0 0
          %775 = vmatpush1.bf16.msra.mxu0 %v622
          %776 = vmatprep.subr.bf16.mxu0 0
          %777 = vmatpush1.bf16.msra.mxu0 %v623
          %778 = vmatprep.subr.bf16.mxu0 0
          %779 = vmatpush1.bf16.msra.mxu0 %v624
          %780 = vmatprep.subr.bf16.mxu0 0
          %781 = vmatpush1.bf16.msra.mxu0 %v625
          %782 = vmatprep.subr.bf16.mxu0 0
          %783 = vmatpush1.bf16.msra.mxu0 %v626
          %784 = vmatprep.subr.bf16.mxu0 0
          %785 = vmatpush1.bf16.msra.mxu0 %v627
          %786 = vmatprep.subr.bf16.mxu0 0
          %787 = vmatpush1.bf16.msra.mxu0 %v628
          %788 = vmatprep.subr.bf16.mxu0 0
          %789 = vmatpush1.bf16.msra.mxu0 %v629
          %790 = vmatprep.subr.bf16.mxu0 0
          %791 = vmatpush1.bf16.msra.mxu0 %v630
          %792 = vmatprep.mubr.bf16.mxu0 %v378
          %793 = vmatmul.mubr.bf16.gmra.mrb[0].mxu0 %v377
          %v794 = vpop.f32.mrb[0].mxu0
          %v795 = vadd.f32 %v698, %v794
          %v796 = vpop.f32.mrb[0].mxu0
          %v797 = vpop.f32.mrb[0].mxu0
          %v798 = vadd.f32 %v701, %v797
          %v799 = vpop.f32.mrb[0].mxu0
          %800 = vmatprep.mubr.bf16.mxu0 %v382
          %801 = vmatmul.mubr.bf16.gmra.mrb[0].mxu0 %v381
          %v802 = vpop.f32.mrb[0].mxu0
          %v803 = vadd.f32 %v706, %v802
          %v804 = vpop.f32.mrb[0].mxu0
          %v805 = vpop.f32.mrb[0].mxu0
          %v806 = vadd.f32 %v709, %v805
          %v807 = vpop.f32.mrb[0].mxu0
          %808 = vmatprep.mubr.bf16.mxu0 %v386
          %809 = vmatmul.mubr.bf16.gmra.mrb[0].mxu0 %v385
          %v810 = vpop.f32.mrb[0].mxu0
          %v811 = vadd.f32 %v714, %v810
          %v812 = vpop.f32.mrb[0].mxu0
          %v813 = vpop.f32.mrb[0].mxu0
          %v814 = vadd.f32 %v717, %v813
          %v815 = vpop.f32.mrb[0].mxu0
          %816 = vmatprep.mubr.bf16.mxu0 %v390
          %817 = vmatmul.mubr.bf16.gmra.mrb[0].mxu0 %v389
          %v818 = vpop.f32.mrb[0].mxu0
          %v819 = vadd.f32 %v722, %v818
          %v820 = vpop.f32.mrb[0].mxu0
          %v821 = vpop.f32.mrb[0].mxu0
          %v822 = vadd.f32 %v725, %v821
          %v823 = vpop.f32.mrb[0].mxu0
          %824 = vmatprep.mubr.bf16.mxu0 %v394
          %825 = vmatmul.mubr.bf16.gmra.mrb[0].mxu0 %v393
          %v826 = vpop.f32.mrb[0].mxu0
          %v827 = vadd.f32 %v730, %v826
          %v828 = vpop.f32.mrb[0].mxu0
          %v829 = vpop.f32.mrb[0].mxu0
          %v830 = vadd.f32 %v733, %v829
          %v831 = vpop.f32.mrb[0].mxu0
          %832 = vmatprep.mubr.bf16.mxu0 %v398
          %833 = vmatmul.mubr.bf16.gmra.mrb[0].mxu0 %v397
          %v834 = vpop.f32.mrb[0].mxu0
          %v835 = vadd.f32 %v738, %v834
          %v836 = vpop.f32.mrb[0].mxu0
          %v837 = vpop.f32.mrb[0].mxu0
          %v838 = vadd.f32 %v741, %v837
          %v839 = vpop.f32.mrb[0].mxu0
          %840 = vmatprep.mubr.bf16.mxu0 %v402
          %841 = vmatmul.mubr.bf16.gmra.mrb[0].mxu0 %v401
          %v842 = vpop.f32.mrb[0].mxu0
          %v843 = vadd.f32 %v746, %v842
          %v844 = vpop.f32.mrb[0].mxu0
          %v845 = vpop.f32.mrb[0].mxu0
          %v846 = vadd.f32 %v749, %v845
          %v847 = vpop.f32.mrb[0].mxu0
          %848 = vmatprep.mubr.bf16.mxu0 %v406
          %849 = vmatmul.mubr.bf16.gmra.mrb[0].mxu0 %v405
          %v850 = vpop.f32.mrb[0].mxu0
          %v851 = vadd.f32 %v754, %v850
          %v852 = vpop.f32.mrb[0].mxu0
          %v853 = vpop.f32.mrb[0].mxu0
          %v854 = vadd.f32 %v757, %v853
          %v855 = vpop.f32.mrb[0].mxu0
          %856 = vdwg.mxu0
          %857 = vst [vmem:[#allocation2] sm:$0xff] %v795
          %858 = vst [vmem:[#allocation2 + $0x8] sm:$0xff] %v798
          %859 = vst [vmem:[#allocation2 + $0x10] sm:$0xff] %v803
          %860 = vst [vmem:[#allocation2 + $0x18] sm:$0xff] %v806
          %861 = vst [vmem:[#allocation2 + $0x20] sm:$0xff] %v811
          %862 = vst [vmem:[#allocation2 + $0x28] sm:$0xff] %v814
          %863 = vst [vmem:[#allocation2 + $0x30] sm:$0xff] %v819
          %864 = vst [vmem:[#allocation2 + $0x38] sm:$0xff] %v822
          %865 = vst [vmem:[#allocation2 + $0x40] sm:$0xff] %v827
          %866 = vst [vmem:[#allocation2 + $0x48] sm:$0xff] %v830
          %867 = vst [vmem:[#allocation2 + $0x50] sm:$0xff] %v835
          %868 = vst [vmem:[#allocation2 + $0x58] sm:$0xff] %v838
          %869 = vst [vmem:[#allocation2 + $0x60] sm:$0xff] %v843
          %870 = vst [vmem:[#allocation2 + $0x68] sm:$0xff] %v846
          %871 = vst [vmem:[#allocation2 + $0x70] sm:$0xff] %v851
          %872 = vst [vmem:[#allocation2 + $0x78] sm:$0xff] %v854
        $region74: #{skipgram_forward.1} parent=65 // pred_fallthru
          _
        %v873 = vld [vmem:[#allocation2] sm:$0xff]
        %v874 = vld [vmem:[#allocation2 + $0x8] sm:$0xff]
        %v875 = vld [vmem:[#allocation2 + $0x10] sm:$0xff]
        %v876 = vld [vmem:[#allocation2 + $0x18] sm:$0xff]
        %v877 = vld [vmem:[#allocation2 + $0x20] sm:$0xff]
        %v878 = vld [vmem:[#allocation2 + $0x28] sm:$0xff]
        %v879 = vld [vmem:[#allocation2 + $0x30] sm:$0xff]
        %v880 = vld [vmem:[#allocation2 + $0x38] sm:$0xff]
        %v881 = vld [vmem:[#allocation2 + $0x40] sm:$0xff]
        %v882 = vld [vmem:[#allocation2 + $0x48] sm:$0xff]
        %v883 = vld [vmem:[#allocation2 + $0x50] sm:$0xff]
        %v884 = vld [vmem:[#allocation2 + $0x58] sm:$0xff]
        %v885 = vld [vmem:[#allocation2 + $0x60] sm:$0xff]
        %v886 = vld [vmem:[#allocation2 + $0x68] sm:$0xff]
        %v887 = vld [vmem:[#allocation2 + $0x70] sm:$0xff]
        %v888 = vld [vmem:[#allocation2 + $0x78] sm:$0xff]
        %v889 = vpack.c.bf16 %v874, %v873
        %v890 = vpack.c.bf16 %v876, %v875
        %v891 = vpack.c.bf16 %v878, %v877
        %v892 = vpack.c.bf16 %v880, %v879
        %v893 = vpack.c.bf16 %v882, %v881
        %v894 = vpack.c.bf16 %v884, %v883
        %v895 = vpack.c.bf16 %v886, %v885
        %v896 = vpack.c.bf16 %v888, %v887
        %v897 = vld [vmem:[%s269] sm:$0xff]
        %v898 = vld [vmem:[%s269 + $0x8] sm:$0xff]
        %v899 = vld [vmem:[%s269 + $0x10] sm:$0xff]
        %v900 = vld [vmem:[%s269 + $0x18] sm:$0xff]
        %v901 = vld [vmem:[%s269 + $0x20] sm:$0xff]
        %v902 = vld [vmem:[%s269 + $0x28] sm:$0xff]
        %v903 = vld [vmem:[%s269 + $0x30] sm:$0xff]
        %v904 = vld [vmem:[%s269 + $0x38] sm:$0xff]
        %v905 = vld [vmem:[%s269 + $0x40] sm:$0xff]
        %v906 = vld [vmem:[%s269 + $0x48] sm:$0xff]
        %v907 = vld [vmem:[%s269 + $0x50] sm:$0xff]
        %v908 = vld [vmem:[%s269 + $0x58] sm:$0xff]
        %v909 = vld [vmem:[%s269 + $0x60] sm:$0xff]
        %v910 = vld [vmem:[%s269 + $0x68] sm:$0xff]
        %v911 = vld [vmem:[%s269 + $0x70] sm:$0xff]
        %v912 = vld [vmem:[%s269 + $0x78] sm:$0xff]
        %v929 = vunpack.c.l.b16 %v897
        %v930 = vunpack.c.h.b16 %v897
        %v931 = vunpack.c.l.b16 %v898
        %v932 = vunpack.c.h.b16 %v898
        %v933 = vunpack.c.l.b16 %v899
        %v934 = vunpack.c.h.b16 %v899
        %v935 = vunpack.c.l.b16 %v900
        %v936 = vunpack.c.h.b16 %v900
        %v937 = vunpack.c.l.b16 %v901
        %v938 = vunpack.c.h.b16 %v901
        %v939 = vunpack.c.l.b16 %v902
        %v940 = vunpack.c.h.b16 %v902
        %v941 = vunpack.c.l.b16 %v903
        %v942 = vunpack.c.h.b16 %v903
        %v943 = vunpack.c.l.b16 %v904
        %v944 = vunpack.c.h.b16 %v904
        %v945 = vunpack.c.l.b16 %v905
        %v946 = vunpack.c.h.b16 %v905
        %v947 = vunpack.c.l.b16 %v906
        %v948 = vunpack.c.h.b16 %v906
        %v949 = vunpack.c.l.b16 %v907
        %v950 = vunpack.c.h.b16 %v907
        %v951 = vunpack.c.l.b16 %v908
        %v952 = vunpack.c.h.b16 %v908
        %v953 = vunpack.c.l.b16 %v909
        %v954 = vunpack.c.h.b16 %v909
        %v955 = vunpack.c.l.b16 %v910
        %v956 = vunpack.c.h.b16 %v910
        %v957 = vunpack.c.l.b16 %v911
        %v958 = vunpack.c.h.b16 %v911
        %v959 = vunpack.c.l.b16 %v912
        %v960 = vunpack.c.h.b16 %v912
        %v961 = vpack.c.b16 %v931, %v929
        %v962 = vpack.c.b16 %v932, %v930
        %v963 = vpack.c.b16 %v935, %v933
        %v964 = vpack.c.b16 %v936, %v934
        %v965 = vpack.c.b16 %v939, %v937
        %v966 = vpack.c.b16 %v940, %v938
        %v967 = vpack.c.b16 %v943, %v941
        %v968 = vpack.c.b16 %v944, %v942
        %v969 = vpack.c.b16 %v947, %v945
        %v970 = vpack.c.b16 %v948, %v946
        %v971 = vpack.c.b16 %v951, %v949
        %v972 = vpack.c.b16 %v952, %v950
        %v973 = vpack.c.b16 %v955, %v953
        %v974 = vpack.c.b16 %v956, %v954
        %v975 = vpack.c.b16 %v959, %v957
        %v976 = vpack.c.b16 %v960, %v958
        %993 = vmatprep.subr.bf16.mxu0 %v962
        %994 = vmatpush1.bf16.msra.mxu0 %v961
        %995 = vmatprep.subr.bf16.mxu0 %v964
        %996 = vmatpush1.bf16.msra.mxu0 %v963
        %997 = vmatprep.subr.bf16.mxu0 %v966
        %998 = vmatpush1.bf16.msra.mxu0 %v965
        %999 = vmatprep.subr.bf16.mxu0 %v968
        %1000 = vmatpush1.bf16.msra.mxu0 %v967
        %1001 = vmatprep.subr.bf16.mxu0 %v970
        %1002 = vmatpush1.bf16.msra.mxu0 %v969
        %1003 = vmatprep.subr.bf16.mxu0 %v972
        %1004 = vmatpush1.bf16.msra.mxu0 %v971
        %1005 = vmatprep.subr.bf16.mxu0 %v974
        %1006 = vmatpush1.bf16.msra.mxu0 %v973
        %1007 = vmatprep.subr.bf16.mxu0 %v976
        %1008 = vmatpush1.bf16.msra.mxu0 %v975
        %1009 = vmatprep.subr.bf16.mxu0 0
        %1010 = vmatpush1.bf16.msra.mxu0 0
        %1011 = vmatprep.subr.bf16.mxu0 0
        %1012 = vmatpush1.bf16.msra.mxu0 0
        %1013 = vmatprep.subr.bf16.mxu0 0
        %1014 = vmatpush1.bf16.msra.mxu0 0
        %1015 = vmatprep.subr.bf16.mxu0 0
        %1016 = vmatpush1.bf16.msra.mxu0 0
        %1017 = vmatprep.subr.bf16.mxu0 0
        %1018 = vmatpush1.bf16.msra.mxu0 0
        %1019 = vmatprep.subr.bf16.mxu0 0
        %1020 = vmatpush1.bf16.msra.mxu0 0
        %1021 = vmatprep.subr.bf16.mxu0 0
        %1022 = vmatpush1.bf16.msra.mxu0 0
        %1023 = vmatprep.subr.bf16.mxu0 0
        %1024 = vmatpush1.bf16.msra.mxu0 0
        %1025 = vmatprep.mubr.bf16.mxu0 0
        %1026 = vmatmul.mubr.bf16.gmra.mrb[0].mxu0 %v889
        %v1027 = vpop.f32.mrb[0].mxu0
        %v1028 = vadd.f32 0.0, %v1027
        %v1029 = vpop.f32.mrb[0].mxu0
        %v1030 = vadd.f32 0.0, %v1029
        %v1031 = vpop.f32.mrb[0].mxu0
        %v1032 = vadd.f32 0.0, %v1031
        %v1033 = vpop.f32.mrb[0].mxu0
        %v1034 = vadd.f32 0.0, %v1033
        %1035 = vmatprep.mubr.bf16.mxu0 0
        %1036 = vmatmul.mubr.bf16.gmra.mrb[0].mxu0 %v890
        %v1037 = vpop.f32.mrb[0].mxu0
        %v1038 = vadd.f32 0.0, %v1037
        %v1039 = vpop.f32.mrb[0].mxu0
        %v1040 = vadd.f32 0.0, %v1039
        %v1041 = vpop.f32.mrb[0].mxu0
        %v1042 = vadd.f32 0.0, %v1041
        %v1043 = vpop.f32.mrb[0].mxu0
        %v1044 = vadd.f32 0.0, %v1043
        %1045 = vmatprep.mubr.bf16.mxu0 0
        %1046 = vmatmul.mubr.bf16.gmra.mrb[0].mxu0 %v891
        %v1047 = vpop.f32.mrb[0].mxu0
        %v1048 = vadd.f32 0.0, %v1047
        %v1049 = vpop.f32.mrb[0].mxu0
        %v1050 = vadd.f32 0.0, %v1049
        %v1051 = vpop.f32.mrb[0].mxu0
        %v1052 = vadd.f32 0.0, %v1051
        %v1053 = vpop.f32.mrb[0].mxu0
        %v1054 = vadd.f32 0.0, %v1053
        %1055 = vmatprep.mubr.bf16.mxu0 0
        %1056 = vmatmul.mubr.bf16.gmra.mrb[0].mxu0 %v892
        %v1057 = vpop.f32.mrb[0].mxu0
        %v1058 = vadd.f32 0.0, %v1057
        %v1059 = vpop.f32.mrb[0].mxu0
        %v1060 = vadd.f32 0.0, %v1059
        %v1061 = vpop.f32.mrb[0].mxu0
        %v1062 = vadd.f32 0.0, %v1061
        %v1063 = vpop.f32.mrb[0].mxu0
        %v1064 = vadd.f32 0.0, %v1063
        %1065 = vmatprep.mubr.bf16.mxu0 0
        %1066 = vmatmul.mubr.bf16.gmra.mrb[0].mxu0 %v893
        %v1067 = vpop.f32.mrb[0].mxu0
        %v1068 = vadd.f32 0.0, %v1067
        %v1069 = vpop.f32.mrb[0].mxu0
        %v1070 = vadd.f32 0.0, %v1069
        %v1071 = vpop.f32.mrb[0].mxu0
        %v1072 = vadd.f32 0.0, %v1071
        %v1073 = vpop.f32.mrb[0].mxu0
        %v1074 = vadd.f32 0.0, %v1073
        %1075 = vmatprep.mubr.bf16.mxu0 0
        %1076 = vmatmul.mubr.bf16.gmra.mrb[0].mxu0 %v894
        %v1077 = vpop.f32.mrb[0].mxu0
        %v1078 = vadd.f32 0.0, %v1077
        %v1079 = vpop.f32.mrb[0].mxu0
        %v1080 = vadd.f32 0.0, %v1079
        %v1081 = vpop.f32.mrb[0].mxu0
        %v1082 = vadd.f32 0.0, %v1081
        %v1083 = vpop.f32.mrb[0].mxu0
        %v1084 = vadd.f32 0.0, %v1083
        %1085 = vmatprep.mubr.bf16.mxu0 0
        %1086 = vmatmul.mubr.bf16.gmra.mrb[0].mxu0 %v895
        %v1087 = vpop.f32.mrb[0].mxu0
        %v1088 = vadd.f32 0.0, %v1087
        %v1089 = vpop.f32.mrb[0].mxu0
        %v1090 = vadd.f32 0.0, %v1089
        %v1091 = vpop.f32.mrb[0].mxu0
        %v1092 = vadd.f32 0.0, %v1091
        %v1093 = vpop.f32.mrb[0].mxu0
        %v1094 = vadd.f32 0.0, %v1093
        %1095 = vmatprep.mubr.bf16.mxu0 0
        %1096 = vmatmul.mubr.bf16.gmra.mrb[0].mxu0 %v896
        %v1097 = vpop.f32.mrb[0].mxu0
        %v1098 = vadd.f32 0.0, %v1097
        %v1099 = vpop.f32.mrb[0].mxu0
        %v1100 = vadd.f32 0.0, %v1099
        %v1101 = vpop.f32.mrb[0].mxu0
        %v1102 = vadd.f32 0.0, %v1101
        %v1103 = vpop.f32.mrb[0].mxu0
        %v1104 = vadd.f32 0.0, %v1103
        %1105 = vdwg.mxu0
        %1106 = vst [vmem:[%s295] sm:$0xff] %v1028
        %1107 = vst [vmem:[%s295 + $0x8] sm:$0xff] %v1030
        %1108 = vst [vmem:[%s295 + $0x10] sm:$0xff] %v1032
        %1109 = vst [vmem:[%s295 + $0x18] sm:$0xff] %v1034
        %1110 = vst [vmem:[%s295 + $0x20] sm:$0xff] %v1038
        %1111 = vst [vmem:[%s295 + $0x28] sm:$0xff] %v1040
        %1112 = vst [vmem:[%s295 + $0x30] sm:$0xff] %v1042
        %1113 = vst [vmem:[%s295 + $0x38] sm:$0xff] %v1044
        %1114 = vst [vmem:[%s295 + $0x40] sm:$0xff] %v1048
        %1115 = vst [vmem:[%s295 + $0x48] sm:$0xff] %v1050
        %1116 = vst [vmem:[%s295 + $0x50] sm:$0xff] %v1052
        %1117 = vst [vmem:[%s295 + $0x58] sm:$0xff] %v1054
        %1118 = vst [vmem:[%s295 + $0x60] sm:$0xff] %v1058
        %1119 = vst [vmem:[%s295 + $0x68] sm:$0xff] %v1060
        %1120 = vst [vmem:[%s295 + $0x70] sm:$0xff] %v1062
        %1121 = vst [vmem:[%s295 + $0x78] sm:$0xff] %v1064
        %1122 = vst [vmem:[%s295 + $0x80] sm:$0xff] %v1068
        %1123 = vst [vmem:[%s295 + $0x88] sm:$0xff] %v1070
        %1124 = vst [vmem:[%s295 + $0x90] sm:$0xff] %v1072
        %1125 = vst [vmem:[%s295 + $0x98] sm:$0xff] %v1074
        %1126 = vst [vmem:[%s295 + $0xa0] sm:$0xff] %v1078
        %1127 = vst [vmem:[%s295 + $0xa8] sm:$0xff] %v1080
        %1128 = vst [vmem:[%s295 + $0xb0] sm:$0xff] %v1082
        %1129 = vst [vmem:[%s295 + $0xb8] sm:$0xff] %v1084
        %1130 = vst [vmem:[%s295 + $0xc0] sm:$0xff] %v1088
        %1131 = vst [vmem:[%s295 + $0xc8] sm:$0xff] %v1090
        %1132 = vst [vmem:[%s295 + $0xd0] sm:$0xff] %v1092
        %1133 = vst [vmem:[%s295 + $0xd8] sm:$0xff] %v1094
        %1134 = vst [vmem:[%s295 + $0xe0] sm:$0xff] %v1098
        %1135 = vst [vmem:[%s295 + $0xe8] sm:$0xff] %v1100
        %1136 = vst [vmem:[%s295 + $0xf0] sm:$0xff] %v1102
        %1137 = vst [vmem:[%s295 + $0xf8] sm:$0xff] %v1104
        %s1138 = sand.u32 %s112, 1
        %s1139 = scalar_lea.sflag [#allocation5], %s1138
        %s1140 = sand.u32 %s112, 1
        %s1141 = smul.addr %s1140, 256
        %s1142 = scalar_lea.vmem [#allocation4], %s1141
        // Predicated region
        $region75: #{skipgram_forward.1} parent=65 // pred_check
          %p1143 = pneg %p122
        $region76: #{skipgram_forward.1} parent=65 // pred_check_branch
          %1145 = sbr.rel (%p1143) target = $region78
        $region77: #{skipgram_forward.1} parent=65 // pred_region
          %s1146 = smul.u32 16, %s21
          %s1147 = smul.u32 2, %s22
          %s1149 = ssub.s32 4096, 4096
          %1150 = vsyncadd %s1139, %s1149
          %s1151 = smul.addr %s1146, 4
          %s1152 = sadd.s32 %s1147, %s1151
          %s1153 = smul.addr %s1152, 128
          %s1154 = scalar_lea.hbm %s3, %s1153
          %s1155 = sshll.u32 %s1142, 4
          %s1156 = int_to_ptr.vmem [resolvable:$true] %s1155
          %1161 = dma.vmem_to_hbm [thread:$0]  %s1156, 4096, %s1154, %s1139, 256, 512, 16
        $region78: #{skipgram_forward.1} parent=65 // pred_fallthru
          _
      $region66: #{skipgram_forward.1} parent=5 // pred_fallthru
        _
      %p1162 = scmp.le.s32.totalorder 2, %s12
      // Predicated region
      $region79: #{skipgram_forward.1} parent=5 // pred_check
        %p1163 = pneg %p1162
      $region80: #{skipgram_forward.1} parent=5 // pred_check_branch
        %1165 = sbr.rel (%p1163) target = $region82
      $region81: #{skipgram_forward.1} parent=5 // pred_region
        %s1166 = ssub.s32 %s12, 2
        // Predicated region
        $region83: #{skipgram_forward.1} parent=81 // pred_check
          %p1167 = pneg %p128
        $region84: #{skipgram_forward.1} parent=81 // pred_check_branch
          %1169 = sbr.rel (%p1167) target = $region86
        $region85: #{skipgram_forward.1} parent=81 // pred_region
          %s1170 = sand.u32 %s113, 1
          %s1171 = scalar_lea.sflag [#allocation5], %s1170
          %s1172 = sand.u32 %s113, 1
          %s1173 = smul.addr %s1172, 256
          %s1174 = scalar_lea.vmem [#allocation4], %s1173
          %1175 = dma.done %s1171, 4096
        $region86: #{skipgram_forward.1} parent=81 // pred_fallthru
          _
      $region82: #{skipgram_forward.1} parent=5 // pred_fallthru
        _
    $region6: #{skipgram_forward.1} parent=1 // loop_footer
      %s16 = sadd.s32 1, %s12
    $region7: #{skipgram_forward.1} parent=1 // loop_footer_branch
      %11 = sbr.rel target = $region3
    $region8: #{skipgram_forward.1} parent=1 // loop_exit
      _
    %1176 = vsyncpa [#allocation5], 1
    %s1177 = scalar_lea.sflag [#allocation5], 1
    %1178 = vsyncpa %s1177, 1

</llo_original>
